<compile_context>
chip_gen: v6e
topology: v6e:2x2x1
jax: 0.10.0
libtpu: 0.0.40
codegen_flags: <defaults>
</compile_context>

<pallas_src>
import jax
import jax.numpy as jnp
from jax.experimental import pallas as pl
from jax.experimental.pallas import tpu as pltpu


# ---------------------------------------------------------------------------
# Pass 1: conv-as-matmul (taps folded into contraction) + per-tile BN partials.
#   x_ref    : (tm, Kc)        bf16   (Kc = KH*KW*Cin)
#   w_ref    : (Kc, Cp)        bf16   (Cp = Cout padded to multiple of 128)
#   conv_ref : (tm, Cp)        f32    conv output tile
#   stats_ref: (8, Cp)         f32    row 0 = per-tile sum, row 1 = sum of
#                                     squares, rows 2..7 = 0
# ---------------------------------------------------------------------------
def _conv_stats_kernel(x_ref, w_ref, conv_ref, stats_ref):
    acc = jnp.dot(x_ref[...], w_ref[...], preferred_element_type=jnp.float32)
    conv_ref[...] = acc
    psum = jnp.sum(acc, axis=0, keepdims=True)         # (1, Cp) f32
    psq = jnp.sum(acc * acc, axis=0, keepdims=True)    # (1, Cp) f32
    row = jax.lax.broadcasted_iota(jnp.int32, stats_ref.shape, 0)
    stats_ref[...] = jnp.where(row == 0, psum, jnp.where(row == 1, psq, 0.0))


# ---------------------------------------------------------------------------
# Pass 2: y = conv * scale + shift ; LeakyReLU(0.1)
# ---------------------------------------------------------------------------
def _bn_act_kernel(conv_ref, scale_ref, shift_ref, o_ref):
    y = conv_ref[...] * scale_ref[...] + shift_ref[...]
    o_ref[...] = jnp.where(y > 0, y, 0.1 * y).astype(o_ref.dtype)


def cnn_block(x_nchw, w_torch, gamma, beta, *, stride=1, padding=1,
              eps=1e-5, tm=None, mxu_dtype=jnp.bfloat16):
    """x_nchw: (N, Cin, H, W); w_torch: (Cout, Cin, KH, KW). Returns (N, Cout, Ho, Wo)."""
    N, Cin, H, W = x_nchw.shape
    Cout, _, KH, KW = w_torch.shape
    Ho = (H + 2 * padding - KH) // stride + 1
    Wo = (W + 2 * padding - KW) // stride + 1
    M = N * Ho * Wo
    Kc = KH * KW * Cin
    Cp = ((Cout + 127) // 128) * 128              # lane-dense output channels

    if tm is None:
        # Largest 8-aligned M tile keeping the double-buffered working set
        # around ~8 MiB (safe for v7x's 64 MiB VMEM / 32 MiB scoped default;
        # v5e/v6e have more headroom).
        bytes_per_row = 2 * Kc * jnp.dtype(mxu_dtype).itemsize + 3 * Cp * 4
        tm = ((8 << 20) // bytes_per_row) // 8 * 8
        tm = int(max(8, min(2048, tm)))
    tm = min(tm, ((M + 7) // 8) * 8)
    M_tiles = pl.cdiv(M, tm)
    M_pad = M_tiles * tm

    # ---- JAX layout glue: im2col with the taps folded into the K dim -------
    x = jnp.transpose(x_nchw, (0, 2, 3, 1))                        # NHWC
    x_pad = jnp.pad(x, ((0, 0), (padding, padding), (padding, padding), (0, 0)))
    cols = []
    for kh in range(KH):
        for kw in range(KW):
            sl = x_pad[:, kh:kh + stride * Ho:stride, kw:kw + stride * Wo:stride, :]
            cols.append(sl.reshape(M, Cin))
    x_col = jnp.concatenate(cols, axis=1)                          # (M, Kc)
    # TODO(synk): on v5e (HBM-bound) avoid this KH*KW-fold activation replication
    # by DMA'ing shifted windows of x_pad per tap inside the kernel instead.
    x_col = jnp.pad(x_col, ((0, M_pad - M), (0, 0))).astype(mxu_dtype)

    w_col = jnp.transpose(w_torch, (2, 3, 1, 0)).reshape(Kc, Cout)
    w_col = jnp.pad(w_col, ((0, 0), (0, Cp - Cout))).astype(mxu_dtype)

    # ---- pass 1: conv matmul + per-tile BN partial statistics --------------
    conv, stats = pl.pallas_call(
        _conv_stats_kernel,
        out_shape=(jax.ShapeDtypeStruct((M_pad, Cp), jnp.float32),
                   jax.ShapeDtypeStruct((M_tiles * 8, Cp), jnp.float32)),
        grid_spec=pltpu.PrefetchScalarGridSpec(
            num_scalar_prefetch=0,
            grid=(M_tiles,),
            in_specs=[
                pl.BlockSpec((tm, Kc), lambda i: (i, 0)),
                pl.BlockSpec((Kc, Cp), lambda i: (0, 0)),
            ],
            out_specs=[
                pl.BlockSpec((tm, Cp), lambda i: (i, 0)),
                pl.BlockSpec((8, Cp), lambda i: (i, 0)),
            ],
        ),
        compiler_params=pltpu.CompilerParams(
            dimension_semantics=("parallel",),
            vmem_limit_bytes=32 * 1024 * 1024),
    )(x_col, w_col)

    # ---- tiny per-channel reduction (training-mode batch stats), f32 --------
    stats = stats.reshape(M_tiles, 8, Cp)
    total_sum = jnp.sum(stats[:, 0, :], axis=0)      # zero-padded rows add 0
    total_sq = jnp.sum(stats[:, 1, :], axis=0)
    mean = total_sum / M
    var = total_sq / M - mean * mean                 # biased variance (training)
    inv = jax.lax.rsqrt(var + eps)
    gamma_p = jnp.pad(gamma.astype(jnp.float32), (0, Cp - Cout))
    beta_p = jnp.pad(beta.astype(jnp.float32), (0, Cp - Cout))
    scale = (gamma_p * inv).reshape(1, Cp)
    shift = (beta_p - mean * gamma_p * inv).reshape(1, Cp)

    # ---- pass 2: apply BN + LeakyReLU(0.1) tile by tile ---------------------
    out_flat = pl.pallas_call(
        _bn_act_kernel,
        out_shape=jax.ShapeDtypeStruct((M_pad, Cp), x_nchw.dtype),
        grid_spec=pltpu.PrefetchScalarGridSpec(
            num_scalar_prefetch=0,
            grid=(M_tiles,),
            in_specs=[
                pl.BlockSpec((tm, Cp), lambda i: (i, 0)),
                pl.BlockSpec((1, Cp), lambda i: (0, 0)),
                pl.BlockSpec((1, Cp), lambda i: (0, 0)),
            ],
            out_specs=pl.BlockSpec((tm, Cp), lambda i: (i, 0)),
        ),
        compiler_params=pltpu.CompilerParams(
            dimension_semantics=("parallel",),
            vmem_limit_bytes=32 * 1024 * 1024),
    )(conv, scale, shift)

    out = out_flat[:M, :Cout].reshape(N, Ho, Wo, Cout)
    return jnp.transpose(out, (0, 3, 1, 2))


def _reference(x, w, gamma, beta, *, stride=1, padding=1, eps=1e-5, conv_dtype=None):
    xc, wc = (x, w) if conv_dtype is None else (x.astype(conv_dtype), w.astype(conv_dtype))
    conv = jax.lax.conv_general_dilated(
        xc, wc, window_strides=(stride, stride),
        padding=[(padding, padding), (padding, padding)],
        dimension_numbers=("NCHW", "OIHW", "NCHW"),
        preferred_element_type=jnp.float32)
    mean = jnp.mean(conv, axis=(0, 2, 3), keepdims=True)
    var = jnp.mean((conv - mean) ** 2, axis=(0, 2, 3), keepdims=True)
    y = (conv - mean) * jax.lax.rsqrt(var + eps)
    y = y * gamma.reshape(1, -1, 1, 1) + beta.reshape(1, -1, 1, 1)
    return jnp.where(y > 0, y, 0.1 * y)


if __name__ == "__main__":
    key = jax.random.PRNGKey(0)
    kx, kw = jax.random.split(key)

    N, Cin, Cout, H, W = 2, 4, 8, 16, 16
    KH = KW = 3

    x = jax.random.normal(kx, (N, Cin, H, W), dtype=jnp.float32)
    w = jax.random.normal(kw, (Cout, Cin, KH, KW), dtype=jnp.float32) * 0.1
    gamma = jnp.ones((Cout,), dtype=jnp.float32)   # BatchNorm2d default init
    beta = jnp.zeros((Cout,), dtype=jnp.float32)

    # tm=128 forces multiple M tiles (M = 512) to exercise the partial-stat path.
    out = cnn_block(x, w, gamma, beta, stride=1, padding=1, tm=128)
    out = jax.block_until_ready(out)
    assert out.shape == (N, Cout, H, W), out.shape

    # Tight check vs. a reference that also feeds bf16 into the conv (MXU dtype).
    ref_bf16 = _reference(x, w, gamma, beta, stride=1, padding=1,
                          conv_dtype=jnp.bfloat16)
    err_bf16 = float(jnp.max(jnp.abs(out - ref_bf16)))
    assert err_bf16 < 1e-3, err_bf16

    # Loose check vs. full-f32 module semantics (bf16 MXU inputs => ~1e-2 abs).
    ref_f32 = _reference(x, w, gamma, beta, stride=1, padding=1)
    err_f32 = float(jnp.max(jnp.abs(out - ref_f32)))
    assert err_f32 < 5e-2, err_f32

    print("KERNEL_OK")
</pallas_src>

<mosaic_0001>
module attributes {stable_mosaic.version = 11 : i64} {
  func.func @_conv_stats_kernel(%arg0: i32, %arg1: memref<128x36xbf16, #tpu.memory_space<vmem>>, %arg2: memref<36x128xbf16, #tpu.memory_space<vmem>>, %arg3: memref<128x128xf32, #tpu.memory_space<vmem>>, %arg4: memref<8x128xf32, #tpu.memory_space<vmem>>) attributes {dimension_semantics = [#tpu.dimension_semantics<parallel>], iteration_bounds = array<i64: 4>, scalar_prefetch = 0 : i64, scratch_operands = 0 : i64, tpu.core_type = #tpu.core_type<tc>, window_params = [{transform_indices = @transform_0, window_bounds = array<i64: 128, 36>}, {pipeline_mode = #tpu.pipeline_mode<synchronous>, transform_indices = @transform_1, window_bounds = array<i64: 36, 128>}, {transform_indices = @transform_2, window_bounds = array<i64: 128, 128>}, {transform_indices = @transform_3, window_bounds = array<i64: 8, 128>}]} {
    %c0 = arith.constant 0 : index
    %c0_0 = arith.constant 0 : index
    %0 = vector.load %arg1[%c0, %c0_0] : memref<128x36xbf16, #tpu.memory_space<vmem>>, vector<128x36xbf16>
    %c0_1 = arith.constant 0 : index
    %c0_2 = arith.constant 0 : index
    %1 = vector.load %arg2[%c0_1, %c0_2] : memref<36x128xbf16, #tpu.memory_space<vmem>>, vector<36x128xbf16>
    %cst = arith.constant dense<0.000000e+00> : vector<128x128xf32>
    %2 = tpu.matmul %0, %1, %cst {dimension_numbers = #tpu.dot_dimension_numbers<[1], [0], [0], [1], [0, 0, 1, 1], [], []>} : vector<128x36xbf16>, vector<36x128xbf16>, vector<128x128xf32> -> vector<128x128xf32>
    %c0_3 = arith.constant 0 : index
    %c0_4 = arith.constant 0 : index
    %3 = vector.load %arg3[%c0_3, %c0_4] : memref<128x128xf32, #tpu.memory_space<vmem>>, vector<128x128xf32>
    tpu.vector_store %arg3[%c0_3, %c0_4], %2 {strides = array<i32>} : memref<128x128xf32, #tpu.memory_space<vmem>>, vector<128x128xf32>,
    %cst_5 = arith.constant dense<0.000000e+00> : vector<128xf32>
    %4 = vector.multi_reduction <add>, %2, %cst_5 [0] : vector<128x128xf32> to vector<128xf32>
    %5 = vector.shape_cast %4 : vector<128xf32> to vector<1x128xf32>
    %6 = arith.mulf %2, %2 : vector<128x128xf32>
    %cst_6 = arith.constant dense<0.000000e+00> : vector<128xf32>
    %7 = vector.multi_reduction <add>, %6, %cst_6 [0] : vector<128x128xf32> to vector<128xf32>
    %8 = vector.shape_cast %7 : vector<128xf32> to vector<1x128xf32>
    %9 = tpu.iota {dimensions = array<i32: 0>} : vector<8x128xi32>
    %c0_i32 = arith.constant 0 : i32
    %10 = vector.broadcast %c0_i32 : i32 to vector<8x128xi32>
    %11 = arith.cmpi eq, %9, %10 : vector<8x128xi32>
    %c1_i32 = arith.constant 1 : i32
    %12 = vector.broadcast %c1_i32 : i32 to vector<8x128xi32>
    %13 = arith.cmpi eq, %9, %12 : vector<8x128xi32>
    %cst_7 = arith.constant 0.000000e+00 : f32
    %14 = vector.shape_cast %8 : vector<1x128xf32> to vector<1x128xf32>
    %15 = vector.broadcast %14 : vector<1x128xf32> to vector<8x128xf32>
    %16 = vector.broadcast %cst_7 : f32 to vector<8x128xf32>
    %17 = arith.select %13, %15, %16 : vector<8x128xi1>, vector<8x128xf32>
    %18 = vector.shape_cast %5 : vector<1x128xf32> to vector<1x128xf32>
    %19 = vector.broadcast %18 : vector<1x128xf32> to vector<8x128xf32>
    %20 = arith.select %11, %19, %17 : vector<8x128xi1>, vector<8x128xf32>
    %c0_8 = arith.constant 0 : index
    %c0_9 = arith.constant 0 : index
    %21 = vector.load %arg4[%c0_8, %c0_9] : memref<8x128xf32, #tpu.memory_space<vmem>>, vector<8x128xf32>
    tpu.vector_store %arg4[%c0_8, %c0_9], %20 {strides = array<i32>} : memref<8x128xf32, #tpu.memory_space<vmem>>, vector<8x128xf32>,
    return
  }
  func.func @transform_0(%arg0: i32) -> (i32, i32) {
    %c0_i32 = arith.constant 0 : i32
    %c0_i32_0 = arith.constant 0 : i32
    return %arg0, %c0_i32 : i32, i32
  }
  func.func @transform_1(%arg0: i32) -> (i32, i32) {
    %c0_i32 = arith.constant 0 : i32
    %c0_i32_0 = arith.constant 0 : i32
    %c0_i32_1 = arith.constant 0 : i32
    return %c0_i32, %c0_i32_0 : i32, i32
  }
  func.func @transform_2(%arg0: i32) -> (i32, i32) {
    %c0_i32 = arith.constant 0 : i32
    %c0_i32_0 = arith.constant 0 : i32
    return %arg0, %c0_i32 : i32, i32
  }
  func.func @transform_3(%arg0: i32) -> (i32, i32) {
    %c0_i32 = arith.constant 0 : i32
    %c0_i32_0 = arith.constant 0 : i32
    return %arg0, %c0_i32 : i32, i32
  }
}

</mosaic_0001>

<llo_original>
// kernel: tpu_custom_call.1
$region0: #{tpu_custom_call.1}
  #allocation0 [shape = 'u32[]', space=smem, size = 0x4, offset = 0x4, fixed_abs, tag = 'smem constant byte address 0x4 - core index']
  #allocation1 [shape = 'u32[144,128]{1,0:T(1,128)}', space=vmem, size = 0x12000, scoped, tag = 'internal scratch']
  %s0 = inlined_call_operand.vmem [shape: bf16[512,36], index: 0, kind: input, shape index: {}]
  %s1 = inlined_call_operand.vmem [shape: bf16[36,128], index: 1, kind: input, shape index: {}]
  %s2 = inlined_call_operand.hbm [shape: f32[512,128], index: 2, kind: output, shape index: {0}]
  %s3 = inlined_call_operand.hbm [shape: f32[32,128], index: 3, kind: output, shape index: {1}]
  %4 = xla_tuple %s2, %s3
  %s5 = sld [smem:[#allocation0]]
  $region49: #{tpu_custom_call.1} parent=0
    _
  %s7 = ssub.s32 1, %s5
  %s8 = scalar_select 0, %s7, %s5
  $region1: #{tpu_custom_call.1} parent=0
    #allocation2 [shape = 'u8[131072]{0}', space=vmem, size = 0x20000, scoped, tag = 'output window, operand 0']
    #allocation3 [shape = 's32[2]{0}', space=sflag, size = 0x8, scoped, tag = 'scoped memory for tpu_custom_call.1']
    #allocation4 [shape = 'u8[8192]{0}', space=vmem, size = 0x2000, scoped, tag = 'output window, operand 1']
    #allocation5 [shape = 's32[2]{0}', space=sflag, size = 0x8, scoped, tag = 'scoped memory for tpu_custom_call.1']
    %9 = vsyncpa [#allocation3], 0
    %s10 = scalar_lea.sflag [#allocation3], 1
    %11 = vsyncpa %s10, 0
    %12 = vsyncpa [#allocation5], 0
    %s13 = scalar_lea.sflag [#allocation5], 1
    %14 = vsyncpa %s13, 0
    loop: start=0, step=1, limit=6
    $region2: #{tpu_custom_call.1} parent=1 // loop_pre_header
      _
    $region3: #{tpu_custom_call.1} parent=1 // loop_header
      %s16 = sphi 0, %s20
      %p17 = scmp.ge.s32.totalorder %s16, 6
      %s26 = sphi 0, %s28
      %s29 = sphi 0, %s26
      %s30 = sphi 0, %s29
      %s46 = sphi 0, %s30
      %s50 = sphi 0, %s50
      %s52 = sphi 0, %s50
      %s53 = sphi 0, %s52
      %s67 = sphi 0, %s53
      %s73 = sphi 0, %s75
      %s76 = sphi 0, %s73
      %s77 = sphi 0, %s76
      %s93 = sphi 0, %s77
      %s99 = sphi 0, %s101
      %s102 = sphi 0, %s99
      %s103 = sphi 0, %s102
      %s119 = sphi 0, %s103
    $region4: #{tpu_custom_call.1} parent=1 // loop_header_branch
      %19 = sbr.rel (%p17) target = $region8
    $region5: #{tpu_custom_call.1} parent=1 // loop_body
      %s21 = ssub.s32 %s16, 1
      %s22 = ssub.s32 %s16, 2
      %s23 = sadd.s32 %s16, 1
      %s24 = ssub.s32 %s16, %s23
      %p25 = scmp.eq.s32.totalorder %s24, 0
      %s27 = sadd.s32 %s26, 1
      %s28 = scalar_select %p25, %s26, %s27
      %p31 = pneg %p25
      %p32 = scmp.eq.s32.totalorder %s16, 3
      %p33 = por %p31, %p32
      %p34 = scmp.ne.s32.totalorder %s26, %s29
      %p35 = scmp.eq.s32.totalorder %s16, 0
      %p36 = por %p34, %p35
      %p37 = scmp.ne.s32.totalorder %s26, %s29
      %p38 = scmp.eq.s32.totalorder %s21, 3
      %p39 = por %p37, %p38
      %p40 = scmp.ne.s32.totalorder %s29, %s30
      %p41 = scmp.eq.s32.totalorder %s21, 0
      %p42 = por %p40, %p41
      %p43 = scmp.ne.s32.totalorder %s29, %s30
      %p44 = scmp.eq.s32.totalorder %s22, 3
      %p45 = por %p43, %p44
      %p47 = scmp.ne.s32.totalorder %s30, %s46
      %p48 = scmp.eq.s32.totalorder %s22, 0
      %p49 = por %p47, %p48
      %s51 = sadd.s32 %s50, 1
      %p54 = scmp.eq.s32.totalorder %s16, 3
      %p55 = scmp.ne.s32.totalorder %s50, %s52
      %p56 = scmp.eq.s32.totalorder %s16, 0
      %p57 = por %p55, %p56
      %p58 = scmp.ne.s32.totalorder %s50, %s52
      %p59 = scmp.eq.s32.totalorder %s21, 3
      %p60 = por %p58, %p59
      %p61 = scmp.ne.s32.totalorder %s52, %s53
      %p62 = scmp.eq.s32.totalorder %s21, 0
      %p63 = por %p61, %p62
      %p64 = scmp.ne.s32.totalorder %s52, %s53
      %p65 = scmp.eq.s32.totalorder %s22, 3
      %p66 = por %p64, %p65
      %p68 = scmp.ne.s32.totalorder %s53, %s67
      %p69 = scmp.eq.s32.totalorder %s22, 0
      %p70 = por %p68, %p69
      %s71 = ssub.s32 %s16, %s23
      %p72 = scmp.eq.s32.totalorder %s71, 0
      %s74 = sadd.s32 %s73, 1
      %s75 = scalar_select %p72, %s73, %s74
      %p78 = pneg %p72
      %p79 = scmp.eq.s32.totalorder %s16, 3
      %p80 = por %p78, %p79
      %p81 = scmp.ne.s32.totalorder %s73, %s76
      %p82 = scmp.eq.s32.totalorder %s16, 0
      %p83 = por %p81, %p82
      %p84 = scmp.ne.s32.totalorder %s73, %s76
      %p85 = scmp.eq.s32.totalorder %s21, 3
      %p86 = por %p84, %p85
      %p87 = scmp.ne.s32.totalorder %s76, %s77
      %p88 = scmp.eq.s32.totalorder %s21, 0
      %p89 = por %p87, %p88
      %p90 = scmp.ne.s32.totalorder %s76, %s77
      %p91 = scmp.eq.s32.totalorder %s22, 3
      %p92 = por %p90, %p91
      %p94 = scmp.ne.s32.totalorder %s77, %s93
      %p95 = scmp.eq.s32.totalorder %s22, 0
      %p96 = por %p94, %p95
      %s97 = ssub.s32 %s16, %s23
      %p98 = scmp.eq.s32.totalorder %s97, 0
      %s100 = sadd.s32 %s99, 1
      %s101 = scalar_select %p98, %s99, %s100
      %p104 = pneg %p98
      %p105 = scmp.eq.s32.totalorder %s16, 3
      %p106 = por %p104, %p105
      %p107 = scmp.ne.s32.totalorder %s99, %s102
      %p108 = scmp.eq.s32.totalorder %s16, 0
      %p109 = por %p107, %p108
      %p110 = scmp.ne.s32.totalorder %s99, %s102
      %p111 = scmp.eq.s32.totalorder %s21, 3
      %p112 = por %p110, %p111
      %p113 = scmp.ne.s32.totalorder %s102, %s103
      %p114 = scmp.eq.s32.totalorder %s21, 0
      %p115 = por %p113, %p114
      %p116 = scmp.ne.s32.totalorder %s102, %s103
      %p117 = scmp.eq.s32.totalorder %s22, 3
      %p118 = por %p116, %p117
      %p120 = scmp.ne.s32.totalorder %s103, %s119
      %p121 = scmp.eq.s32.totalorder %s22, 0
      %p122 = por %p120, %p121
      %p123 = scmp.le.s32.totalorder 1, %s16
      %p124 = scmp.lt.s32.totalorder %s16, 5
      %p125 = pnand %p123, %p124
      %p126 = pneg %p125
      // Predicated region
      $region9: #{tpu_custom_call.1} parent=5 // pred_check
        _
      $region10: #{tpu_custom_call.1} parent=5 // pred_check_branch
        %128 = sbr.rel (%p125) target = $region12
      $region11: #{tpu_custom_call.1} parent=5 // pred_region
        %s129 = ssub.s32 %s16, 1
        // Predicated region
        $region13: #{tpu_custom_call.1} parent=11 // pred_check
          %p130 = pneg %p63
        $region14: #{tpu_custom_call.1} parent=11 // pred_check_branch
          %132 = sbr.rel (%p130) target = $region16
        $region15: #{tpu_custom_call.1} parent=11 // pred_region
          _
        $region16: #{tpu_custom_call.1} parent=11 // pred_fallthru
          _
      $region12: #{tpu_custom_call.1} parent=5 // pred_fallthru
        _
      %p133 = scmp.lt.s32.totalorder %s16, 4
      // Predicated region
      $region17: #{tpu_custom_call.1} parent=5 // pred_check
        %p134 = pneg %p133
      $region18: #{tpu_custom_call.1} parent=5 // pred_check_branch
        %136 = sbr.rel (%p134) target = $region20
      $region19: #{tpu_custom_call.1} parent=5 // pred_region
        // Predicated region
        $region21: #{tpu_custom_call.1} parent=19 // pred_check
          %p137 = pneg %p36
        $region22: #{tpu_custom_call.1} parent=19 // pred_check_branch
          %139 = sbr.rel (%p137) target = $region24
        $region23: #{tpu_custom_call.1} parent=19 // pred_region
          %s140 = smul.u32 16, %s16
          %p141 = scmp.lt.s32.totalorder %s140, 63
          %s142 = scalar_select %p141, %s140, 63
          %s143 = smul.addr %s142, 4
          %s144 = scalar_lea.vmem %s0, %s143
          %s145 = smul.u32 16, %s16
        $region24: #{tpu_custom_call.1} parent=19 // pred_fallthru
          _
      $region20: #{tpu_custom_call.1} parent=5 // pred_fallthru
        _
      %p146 = scmp.le.s32.totalorder 1, %s16
      %p147 = scmp.lt.s32.totalorder %s16, 5
      %p148 = pnand %p146, %p147
      %p149 = pneg %p148
      // Predicated region
      $region25: #{tpu_custom_call.1} parent=5 // pred_check
        _
      $region26: #{tpu_custom_call.1} parent=5 // pred_check_branch
        %151 = sbr.rel (%p148) target = $region28
      $region27: #{tpu_custom_call.1} parent=5 // pred_region
        %s152 = ssub.s32 %s16, 1
        %s153 = smul.u32 16, %s21
        %p154 = scmp.lt.s32.totalorder %s153, 63
        %s155 = scalar_select %p154, %s153, 63
        %s156 = smul.addr %s155, 4
        %s157 = scalar_lea.vmem %s0, %s156
        %p158 = pneg %p42
        %p159 = pneg %p39
        %p160 = pneg %p63
        %p161 = pneg %p60
        %p162 = pneg %p89
        %p163 = pneg %p86
        %s164 = sand.u32 %s76, 1
        %s165 = scalar_lea.sflag [#allocation3], %s164
        %s166 = sand.u32 %s76, 1
        %s167 = smul.addr %s166, 128
        %s168 = scalar_lea.vmem [#allocation2], %s167
        %p169 = pneg %p115
        %p170 = pneg %p112
        %s171 = sand.u32 %s102, 1
        %s172 = scalar_lea.sflag [#allocation5], %s171
        %s173 = sand.u32 %s102, 1
        %s174 = smul.addr %s173, 8
        %s175 = scalar_lea.vmem [#allocation4], %s174
        %s176 = smul.u32 16, %s21
        %p177 = scmp.lt.s32.totalorder %s176, 63
        %s178 = scalar_select %p177, %s176, 63
        %s179 = smul.addr %s178, 4
        %s180 = scalar_lea.vmem %s0, %s179
        %s181 = smul.u32 16, %s21
        %s182 = smul.u32 16, %s21
        %v184 = vld [vmem:[%s180] sm:$0xf]
        %v185 = vld [vmem:[%s180 + $0x4] sm:$0xf]
        %v186 = vld [vmem:[%s180 + $0x8] sm:$0xf]
        %v187 = vld [vmem:[%s180 + $0xc] sm:$0xf]
        %v188 = vld [vmem:[%s180 + $0x10] sm:$0xf]
        %v189 = vld [vmem:[%s180 + $0x14] sm:$0xf]
        %v190 = vld [vmem:[%s180 + $0x18] sm:$0xf]
        %v191 = vld [vmem:[%s180 + $0x1c] sm:$0xf]
        %v192 = vld [vmem:[%s180 + $0x20] sm:$0xf]
        %v193 = vld [vmem:[%s180 + $0x24] sm:$0xf]
        %v194 = vld [vmem:[%s180 + $0x28] sm:$0xf]
        %v195 = vld [vmem:[%s180 + $0x2c] sm:$0xf]
        %v196 = vld [vmem:[%s180 + $0x30] sm:$0xf]
        %v197 = vld [vmem:[%s180 + $0x34] sm:$0xf]
        %v198 = vld [vmem:[%s180 + $0x38] sm:$0xf]
        %v199 = vld [vmem:[%s180 + $0x3c] sm:$0xf]
        %v200 = vld [vmem:[%s1] sm:$0xf]
        %v201 = vld [vmem:[%s1 + $0x4] sm:$0xf]
        %v202 = vld [vmem:[%s1 + $0x8] sm:$0xf]
        %v203 = vld [vmem:[%s1 + $0xc] sm:$0xf]
        %v204 = vld [vmem:[%s1 + $0x10] sm:$0x3]
        %v221 = vunpack.c.l.b16 %v184
        %v222 = vunpack.c.l.b16 %v185
        %v223 = vunpack.c.l.b16 %v186
        %v224 = vunpack.c.l.b16 %v187
        %v225 = vunpack.c.l.b16 %v188
        %v226 = vunpack.c.l.b16 %v189
        %v227 = vunpack.c.l.b16 %v190
        %v228 = vunpack.c.l.b16 %v191
        %v229 = vunpack.c.l.b16 %v192
        %v230 = vunpack.c.l.b16 %v193
        %v231 = vunpack.c.l.b16 %v194
        %v232 = vunpack.c.l.b16 %v195
        %v233 = vunpack.c.l.b16 %v196
        %v234 = vunpack.c.l.b16 %v197
        %v235 = vunpack.c.l.b16 %v198
        %v236 = vunpack.c.l.b16 %v199
        %v237 = vpack.c.b16 %v222, %v221
        %v238 = vpack.c.b16 %v224, %v223
        %v239 = vpack.c.b16 %v226, %v225
        %v240 = vpack.c.b16 %v228, %v227
        %v241 = vpack.c.b16 %v230, %v229
        %v242 = vpack.c.b16 %v232, %v231
        %v243 = vpack.c.b16 %v234, %v233
        %v244 = vpack.c.b16 %v236, %v235
        %v250 = vunpack.c.l.b16 %v200
        %v251 = vunpack.c.l.b16 %v201
        %v252 = vunpack.c.l.b16 %v202
        %v253 = vunpack.c.l.b16 %v203
        %v254 = vunpack.c.l.b16 %v204
        %v255 = vpack.c.b16 %v251, %v250
        %v256 = vpack.c.b16 %v253, %v252
        %v257 = vpack.c.b16 %v254, %v254
        %vm260 = vcmask 293888
        %v262 = vsel %vm260, %v237, 0
        %v265 = vsel %vm260, %v238, 0
        %v268 = vsel %vm260, %v239, 0
        %v271 = vsel %vm260, %v240, 0
        %v274 = vsel %vm260, %v241, 0
        %v277 = vsel %vm260, %v242, 0
        %v280 = vsel %vm260, %v243, 0
        %v283 = vsel %vm260, %v244, 0
        %vm285 = vcmask 1041408
        %v287 = vsel %vm285, %v257, 0
        %289 = vmatprep.subr.bf16.mxu0 0
        %290 = vmatpush1.bf16.msra.mxu0 0
        %291 = vmatprep.subr.bf16.mxu0 0
        %292 = vmatpush1.bf16.msra.mxu0 0
        %293 = vmatprep.subr.bf16.mxu0 0
        %294 = vmatpush1.bf16.msra.mxu0 0
        %295 = vmatprep.subr.bf16.mxu0 0
        %296 = vmatpush1.bf16.msra.mxu0 0
        %297 = vmatprep.subr.bf16.mxu0 0
        %298 = vmatpush1.bf16.msra.mxu0 0
        %299 = vmatprep.subr.bf16.mxu0 0
        %300 = vmatpush1.bf16.msra.mxu0 %v287
        %301 = vmatprep.subr.bf16.mxu0 0
        %302 = vmatpush1.bf16.msra.mxu0 %v256
        %303 = vmatprep.subr.bf16.mxu0 0
        %304 = vmatpush1.bf16.msra.mxu0 %v255
        %305 = vmatprep.subr.bf16.mxu0 0
        %306 = vmatpush2.bf16.msra.mxu0 0
        %307 = vmatprep.subr.bf16.mxu0 0
        %308 = vmatpush2.bf16.msra.mxu0 0
        %309 = vmatprep.subr.bf16.mxu0 0
        %310 = vmatpush2.bf16.msra.mxu0 0
        %311 = vmatprep.subr.bf16.mxu0 0
        %312 = vmatpush2.bf16.msra.mxu0 0
        %313 = vmatprep.subr.bf16.mxu0 0
        %314 = vmatpush2.bf16.msra.mxu0 0
        %315 = vmatprep.subr.bf16.mxu0 0
        %316 = vmatpush2.bf16.msra.mxu0 0
        %317 = vmatprep.subr.bf16.mxu0 0
        %318 = vmatpush2.bf16.msra.mxu0 0
        %319 = vmatprep.subr.bf16.mxu0 0
        %320 = vmatpush2.bf16.msra.mxu0 0
        %321 = vmatprep.mubr.bf16.mxu0 0
        %322 = vmatmul.mubr.bf16.gmra.mxu0 %v262
        %v323 = vpop.f32.mrf.mxu0
        %v324 = vadd.f32 0.0, %v323
        %v325 = vpop.f32.mrf.mxu0
        %v326 = vpop.f32.mrf.mxu0
        %v327 = vadd.f32 0.0, %v326
        %v328 = vpop.f32.mrf.mxu0
        %329 = vmatprep.mubr.bf16.mxu0 0
        %330 = vmatmul.mubr.bf16.gmra.mxu0 %v265
        %v331 = vpop.f32.mrf.mxu0
        %v332 = vadd.f32 0.0, %v331
        %v333 = vpop.f32.mrf.mxu0
        %v334 = vpop.f32.mrf.mxu0
        %v335 = vadd.f32 0.0, %v334
        %v336 = vpop.f32.mrf.mxu0
        %337 = vmatprep.mubr.bf16.mxu0 0
        %338 = vmatmul.mubr.bf16.gmra.mxu0 %v268
        %v339 = vpop.f32.mrf.mxu0
        %v340 = vadd.f32 0.0, %v339
        %v341 = vpop.f32.mrf.mxu0
        %v342 = vpop.f32.mrf.mxu0
        %v343 = vadd.f32 0.0, %v342
        %v344 = vpop.f32.mrf.mxu0
        %345 = vmatprep.mubr.bf16.mxu0 0
        %346 = vmatmul.mubr.bf16.gmra.mxu0 %v271
        %v347 = vpop.f32.mrf.mxu0
        %v348 = vadd.f32 0.0, %v347
        %v349 = vpop.f32.mrf.mxu0
        %v350 = vpop.f32.mrf.mxu0
        %v351 = vadd.f32 0.0, %v350
        %v352 = vpop.f32.mrf.mxu0
        %353 = vmatprep.mubr.bf16.mxu0 0
        %354 = vmatmul.mubr.bf16.gmra.mxu0 %v274
        %v355 = vpop.f32.mrf.mxu0
        %v356 = vadd.f32 0.0, %v355
        %v357 = vpop.f32.mrf.mxu0
        %v358 = vpop.f32.mrf.mxu0
        %v359 = vadd.f32 0.0, %v358
        %v360 = vpop.f32.mrf.mxu0
        %361 = vmatprep.mubr.bf16.mxu0 0
        %362 = vmatmul.mubr.bf16.gmra.mxu0 %v277
        %v363 = vpop.f32.mrf.mxu0
        %v364 = vadd.f32 0.0, %v363
        %v365 = vpop.f32.mrf.mxu0
        %v366 = vpop.f32.mrf.mxu0
        %v367 = vadd.f32 0.0, %v366
        %v368 = vpop.f32.mrf.mxu0
        %369 = vmatprep.mubr.bf16.mxu0 0
        %370 = vmatmul.mubr.bf16.gmra.mxu0 %v280
        %v371 = vpop.f32.mrf.mxu0
        %v372 = vadd.f32 0.0, %v371
        %v373 = vpop.f32.mrf.mxu0
        %v374 = vpop.f32.mrf.mxu0
        %v375 = vadd.f32 0.0, %v374
        %v376 = vpop.f32.mrf.mxu0
        %377 = vmatprep.mubr.bf16.mxu0 0
        %378 = vmatmul.mubr.bf16.gmra.mxu0 %v283
        %v379 = vpop.f32.mrf.mxu0
        %v380 = vadd.f32 0.0, %v379
        %v381 = vpop.f32.mrf.mxu0
        %v382 = vpop.f32.mrf.mxu0
        %v383 = vadd.f32 0.0, %v382
        %v384 = vpop.f32.mrf.mxu0
        %385 = vdwg.mxu0
        %386 = vst [vmem:[%s168] sm:$0xff] %v324
        %387 = vst [vmem:[%s168 + $0x8] sm:$0xff] %v327
        %388 = vst [vmem:[%s168 + $0x10] sm:$0xff] %v332
        %389 = vst [vmem:[%s168 + $0x18] sm:$0xff] %v335
        %390 = vst [vmem:[%s168 + $0x20] sm:$0xff] %v340
        %391 = vst [vmem:[%s168 + $0x28] sm:$0xff] %v343
        %392 = vst [vmem:[%s168 + $0x30] sm:$0xff] %v348
        %393 = vst [vmem:[%s168 + $0x38] sm:$0xff] %v351
        %394 = vst [vmem:[%s168 + $0x40] sm:$0xff] %v356
        %395 = vst [vmem:[%s168 + $0x48] sm:$0xff] %v359
        %396 = vst [vmem:[%s168 + $0x50] sm:$0xff] %v364
        %397 = vst [vmem:[%s168 + $0x58] sm:$0xff] %v367
        %398 = vst [vmem:[%s168 + $0x60] sm:$0xff] %v372
        %399 = vst [vmem:[%s168 + $0x68] sm:$0xff] %v375
        %400 = vst [vmem:[%s168 + $0x70] sm:$0xff] %v380
        %401 = vst [vmem:[%s168 + $0x78] sm:$0xff] %v383
        %v402 = vadd.f32 %v324, %v327
        %v403 = vadd.f32 %v402, %v332
        %v404 = vadd.f32 %v403, %v335
        %v405 = vadd.f32 %v404, %v340
        %v406 = vadd.f32 %v405, %v343
        %v407 = vadd.f32 %v406, %v348
        %v408 = vadd.f32 %v407, %v351
        %v409 = vadd.f32 %v408, %v356
        %v410 = vadd.f32 %v409, %v359
        %v411 = vadd.f32 %v410, %v364
        %v412 = vadd.f32 %v411, %v367
        %v413 = vadd.f32 %v412, %v372
        %v414 = vadd.f32 %v413, %v375
        %v415 = vadd.f32 %v414, %v380
        %v416 = vadd.f32 %v415, %v383
        %v417 = vrot.slane %v416, 4
        %v418 = vadd.f32 %v416, %v417
        %v419 = vrot.slane %v418, 2
        %v420 = vadd.f32 %v418, %v419
        %v421 = vrot.slane %v420, 1
        %v422 = vadd.f32 %v420, %v421
        %v423 = vmul.f32 %v324, %v324
        %v424 = vmul.f32 %v327, %v327
        %v425 = vmul.f32 %v332, %v332
        %v426 = vmul.f32 %v335, %v335
        %v427 = vmul.f32 %v340, %v340
        %v428 = vmul.f32 %v343, %v343
        %v429 = vmul.f32 %v348, %v348
        %v430 = vmul.f32 %v351, %v351
        %v431 = vmul.f32 %v356, %v356
        %v432 = vmul.f32 %v359, %v359
        %v433 = vmul.f32 %v364, %v364
        %v434 = vmul.f32 %v367, %v367
        %v435 = vmul.f32 %v372, %v372
        %v436 = vmul.f32 %v375, %v375
        %v437 = vmul.f32 %v380, %v380
        %v438 = vmul.f32 %v383, %v383
        %v439 = vadd.f32 %v423, %v424
        %v440 = vadd.f32 %v439, %v425
        %v441 = vadd.f32 %v440, %v426
        %v442 = vadd.f32 %v441, %v427
        %v443 = vadd.f32 %v442, %v428
        %v444 = vadd.f32 %v443, %v429
        %v445 = vadd.f32 %v444, %v430
        %v446 = vadd.f32 %v445, %v431
        %v447 = vadd.f32 %v446, %v432
        %v448 = vadd.f32 %v447, %v433
        %v449 = vadd.f32 %v448, %v434
        %v450 = vadd.f32 %v449, %v435
        %v451 = vadd.f32 %v450, %v436
        %v452 = vadd.f32 %v451, %v437
        %v453 = vadd.f32 %v452, %v438
        %v454 = vrot.slane %v453, 4
        %v455 = vadd.f32 %v453, %v454
        %v456 = vrot.slane %v455, 2
        %v457 = vadd.f32 %v455, %v456
        %v458 = vrot.slane %v457, 1
        %v459 = vadd.f32 %v457, %v458
        %v460 = vlaneseq
        %v461 = vshrl.u32 %v460, 7
        %vm462 = vcmp.eq.s32.totalorder %v461, 0
        %vm463 = vcmp.eq.s32.totalorder %v461, 1
        %v464 = vsel %vm463, %v459, 0.0
        %v465 = vsel %vm462, %v422, %v464
        %466 = vst [vmem:[%s175] sm:$0xff] %v465
        %s467 = sand.u32 %s76, 1
        %s468 = scalar_lea.sflag [#allocation3], %s467
        %s469 = sand.u32 %s76, 1
        %s470 = smul.addr %s469, 128
        %s471 = scalar_lea.vmem [#allocation2], %s470
        %s472 = sand.u32 %s102, 1
        %s473 = scalar_lea.sflag [#allocation5], %s472
        %s474 = sand.u32 %s102, 1
        %s475 = smul.addr %s474, 8
        %s476 = scalar_lea.vmem [#allocation4], %s475
        // Predicated region
        $region29: #{tpu_custom_call.1} parent=27 // pred_check
          %p477 = pneg %p86
        $region30: #{tpu_custom_call.1} parent=27 // pred_check_branch
          %479 = sbr.rel (%p477) target = $region32
        $region31: #{tpu_custom_call.1} parent=27 // pred_region
          %s480 = smul.u32 16, %s21
          %s482 = ssub.s32 2048, 2048
          %483 = vsyncadd %s468, %s482
          %s484 = smul.addr %s480, 128
          %s485 = scalar_lea.hbm %s2, %s484
          %s486 = sshll.u32 %s471, 4
          %s487 = int_to_ptr.vmem [resolvable:$true] %s486
          %492 = dma.vmem_to_hbm [thread:$0]  %s487, 2048, %s485, %s468, 128, 128, 8
        $region32: #{tpu_custom_call.1} parent=27 // pred_fallthru
          _
        // Predicated region
        $region33: #{tpu_custom_call.1} parent=27 // pred_check
          %p493 = pneg %p112
        $region34: #{tpu_custom_call.1} parent=27 // pred_check_branch
          %495 = sbr.rel (%p493) target = $region36
        $region35: #{tpu_custom_call.1} parent=27 // pred_region
          %s497 = ssub.s32 128, 128
          %498 = vsyncadd %s473, %s497
          %s499 = smul.addr %s21, 128
          %s500 = scalar_lea.hbm %s3, %s499
          %s502 = sshll.u32 %s476, 4
          %s503 = int_to_ptr.vmem [resolvable:$true] %s502
          %505 = dma.vmem_to_hbm [thread:$0]  %s503, 128, %s500, %s473
        $region36: #{tpu_custom_call.1} parent=27 // pred_fallthru
          _
      $region28: #{tpu_custom_call.1} parent=5 // pred_fallthru
        _
      %p506 = scmp.le.s32.totalorder 2, %s16
      // Predicated region
      $region37: #{tpu_custom_call.1} parent=5 // pred_check
        %p507 = pneg %p506
      $region38: #{tpu_custom_call.1} parent=5 // pred_check_branch
        %509 = sbr.rel (%p507) target = $region40
      $region39: #{tpu_custom_call.1} parent=5 // pred_region
        %s510 = ssub.s32 %s16, 2
        // Predicated region
        $region41: #{tpu_custom_call.1} parent=39 // pred_check
          %p511 = pneg %p92
        $region42: #{tpu_custom_call.1} parent=39 // pred_check_branch
          %513 = sbr.rel (%p511) target = $region44
        $region43: #{tpu_custom_call.1} parent=39 // pred_region
          %s514 = sand.u32 %s77, 1
          %s515 = scalar_lea.sflag [#allocation3], %s514
          %s516 = sand.u32 %s77, 1
          %s517 = smul.addr %s516, 128
          %s518 = scalar_lea.vmem [#allocation2], %s517
          %519 = dma.done %s515, 2048
        $region44: #{tpu_custom_call.1} parent=39 // pred_fallthru
          _
        // Predicated region
        $region45: #{tpu_custom_call.1} parent=39 // pred_check
          %p520 = pneg %p118
        $region46: #{tpu_custom_call.1} parent=39 // pred_check_branch
          %522 = sbr.rel (%p520) target = $region48
        $region47: #{tpu_custom_call.1} parent=39 // pred_region
          %s523 = sand.u32 %s103, 1
          %s524 = scalar_lea.sflag [#allocation5], %s523
          %s525 = sand.u32 %s103, 1
          %s526 = smul.addr %s525, 8
          %s527 = scalar_lea.vmem [#allocation4], %s526
          %528 = dma.done %s524, 128
        $region48: #{tpu_custom_call.1} parent=39 // pred_fallthru
          _
      $region40: #{tpu_custom_call.1} parent=5 // pred_fallthru
        _
    $region6: #{tpu_custom_call.1} parent=1 // loop_footer
      %s20 = sadd.s32 1, %s16
    $region7: #{tpu_custom_call.1} parent=1 // loop_footer_branch
      %15 = sbr.rel target = $region3
    $region8: #{tpu_custom_call.1} parent=1 // loop_exit
      _
    %529 = vsyncpa [#allocation3], 1
    %s530 = scalar_lea.sflag [#allocation3], 1
    %531 = vsyncpa %s530, 1
    %532 = vsyncpa [#allocation5], 1
    %s533 = scalar_lea.sflag [#allocation5], 1
    %534 = vsyncpa %s533, 1

</llo_original>
